<compile_context>
chip_gen: v6e
topology: v6e:2x2x1
jax: 0.10.0
libtpu: 0.0.40
codegen_flags: <defaults>
</compile_context>

<pallas_src>
import numpy as np
import jax
import jax.numpy as jnp
from jax.experimental import pallas as pl
from jax.experimental.pallas import tpu as pltpu

# ---------------- deterministic "buffers" (mirror the torch __init__) --------
_B  = np.float32(1.15)
_G  = np.float32(0.66)
_C1 = np.float32(3424 / 2 ** 12)
_C2 = np.float32(2413 / 2 ** 7)
_C3 = np.float32(2392 / 2 ** 7)
_N  = np.float32(2610 / 2 ** 14)
_P  = np.float32(1.7 * 2523 / 2 ** 5)
_D  = np.float32(-0.56)
_D0 = np.float32(1.6295499532821567e-11)

_XYZ_TO_XPYPZ = np.array([[_B, 0.0, -(_B - 1.0)],
                          [-(_G - 1.0), _G, 0.0],
                          [0.0, 0.0, 1.0]], dtype=np.float32)
_XYZ_TO_LMS = np.array([[0.41478972, 0.579999, 0.014648],
                        [-0.20151, 1.120649, 0.0531008],
                        [-0.0166008, 0.2648, 0.6684799]], dtype=np.float32)
_LMS_PRIME_TO_IAB = np.array([[0.5, 0.5, 0.0],
                              [3.524, -4.066708, 0.542708],
                              [0.199076, 1.096799, -1.295875]], dtype=np.float32)

# inverses (as in JzazbzToCIEXYZ.__init__)
_IAB_TO_LMSP   = np.linalg.inv(_LMS_PRIME_TO_IAB).astype(np.float32)
_LMS_TO_XYZ    = np.linalg.inv(_XYZ_TO_LMS).astype(np.float32)
_XPYPZP_TO_XYZ = np.linalg.inv(_XYZ_TO_XPYPZ).astype(np.float32)
# fold the two linear stages (exact composition): xyz = lms @ _M32.T
_M32 = (_XPYPZP_TO_XYZ @ _LMS_TO_XYZ).astype(np.float32)

_INV_P   = np.float32(1.0) / _P
_INV_N   = np.float32(1.0) / _N
_ONE_P_D = np.float32(1.0) + _D          # 1 + d  = 0.44
_NEG_D   = -_D                           # -d     = 0.56
_LOG_1E4 = np.float32(np.log(10000.0))


# ---------------------------- Pallas kernel ----------------------------------
def _jzazbz_to_xyz_kernel(x_ref, o_ref):
    # block shape: (1, 3, tile_r, C) float32; each channel is a lane-dense tile
    jz = x_ref[0, 0, :, :]
    az = x_ref[0, 1, :, :]
    bz = x_ref[0, 2, :, :]

    # Jz -> Iz : EUP approx reciprocal + ONE Newton-Raphson step.  The refined
    # reciprocal has ~1e-7 relative error, so it is exact at f32 even for very
    # dark pixels where the downstream 1/n power amplifies errors.
    jzp = jz + _D0
    den = _ONE_P_D + _NEG_D * jzp
    r = pl.reciprocal(den, approx=True)
    r = r * (2.0 - den * r)
    iz = jzp * r

    # [Iz, az, bz] @ iab_to_lms_prime.T  (unrolled constant FMAs on the VPU).
    # The first column of the inverse is analytically [1, 1, 1] (each row of
    # lms_prime_to_iab sums to {1, 0, 0}), so the Iz coefficient is exactly 1.
    M1 = _IAB_TO_LMSP
    lp = iz + M1[0, 1] * az + M1[0, 2] * bz
    mp = iz + M1[1, 1] * az + M1[1, 2] * bz
    sp = iz + M1[2, 1] * az + M1[2, 2] * bz

    # inverse PQ, divide-free:
    #   1e4 * ((c1 - v^(1/p)) / (c3*v^(1/p) - c2))^(1/n)
    # = exp( (log(v^(1/p) - c1) - log(c2 - c3*v^(1/p))) / n + log(1e4) )
    # Both log arguments are > 0 for in-gamut inputs; out-of-gamut inputs give
    # NaN exactly like the reference's fractional pow.
    def pq_inverse(v):
        vp = jnp.exp(_INV_P * jnp.log(v))
        return jnp.exp(_INV_N * (jnp.log(vp - _C1) - jnp.log(_C2 - _C3 * vp))
                       + _LOG_1E4)

    l = pq_inverse(lp)
    m = pq_inverse(mp)
    s = pq_inverse(sp)

    # folded (xpypzp_to_xyz @ lms_to_xyz): single 3x3 stage, lms -> XYZ
    M = _M32
    o_ref[0, 0, :, :] = M[0, 0] * l + M[0, 1] * m + M[0, 2] * s
    o_ref[0, 1, :, :] = M[1, 0] * l + M[1, 1] * m + M[1, 2] * s
    o_ref[0, 2, :, :] = M[2, 0] * l + M[2, 1] * m + M[2, 2] * s


# ------------------------------ tiling helpers --------------------------------
def _vmem_budget():
    """(per-block byte target, VMEM capacity) — generation aware."""
    cap = 64 * 1024 * 1024                       # conservative default (v7x per-TC)
    try:
        info = pltpu.get_tpu_info()
        cap = int(getattr(info, "vmem_capacity_bytes", cap))
    except Exception:
        pass
    target = (4 << 20) if cap >= (100 << 20) else (2 << 20)
    return target, cap


def _pick_lane_width(n_pix):
    """Largest lane-dense width (multiple of 128) dividing n_pix; else 128 + pad."""
    for c in (2048, 1024, 512, 256, 128):
        if n_pix % c == 0:
            return c
    return 128


def _pick_row_tiling(R_raw, batch, C, target_bytes):
    """Pick (tile_r, n_blk) with tile_r * n_blk >= R_raw.

    Trace-time scored search balancing row-padding traffic, per-grid-step
    overhead (~0.35 us), pipeline depth (>=3 programs to overlap DMA/compute,
    ideally >=8), even program count (v7x 2-TC balance) and block size.
    tile_r is a multiple of 8 unless a single block spans the full row dim.
    """
    if R_raw <= 8:
        return R_raw, 1
    row_bytes = 3 * C * 4                                    # one block-row, 3 channels, f32
    hi = max(8, min((target_bytes // row_bytes) // 8 * 8, -(-R_raw // 8) * 8))
    dma_us = 2.0 * 3.0 * R_raw * C * 4 / 1.0e6               # in + out @ ~1 TB/s, per batch item

    candidates = [(t, -(-R_raw // t)) for t in range(8, hi + 1, 8)]
    if (R_raw % 8) and (R_raw * row_bytes <= target_bytes):
        candidates.append((R_raw, 1))                        # full-dim block (exempt from 8-row rule)

    best = None
    for t, n_blk in candidates:
        pad_frac = (t * n_blk - R_raw) / R_raw
        programs = batch * n_blk
        block_bytes = t * row_bytes
        score = (pad_frac                                    # extra HBM traffic
                 + 0.35 * n_blk / dma_us                     # per-grid-step overhead
                 + (0.7 if programs < 3 else 0.0)            # no DMA/compute overlap possible
                 + 0.15 * max(0, 8 - programs) / 8.0         # shallow pipeline
                 + (0.05 if programs % 2 else 0.0)           # v7x megacore imbalance
                 + 0.10 * max(0.0, 1.0 - block_bytes / (256 * 1024)))  # tiny-block DMA
        if best is None or score < best[0]:
            best = (score, t, n_blk)
    return best[1], best[2]


def _run_pallas(planes, tile_r, vmem_limit_bytes, cost):
    b, _, R, C = planes.shape
    block = (1, 3, tile_r, C)
    return pl.pallas_call(
        _jzazbz_to_xyz_kernel,
        out_shape=jax.ShapeDtypeStruct(planes.shape, planes.dtype),
        grid=(b, R // tile_r),
        in_specs=[pl.BlockSpec(block, lambda i, j: (i, 0, j, 0))],
        out_specs=pl.BlockSpec(block, lambda i, j: (i, 0, j, 0)),
        compiler_params=pltpu.CompilerParams(
            dimension_semantics=("parallel", "parallel"),
            vmem_limit_bytes=int(vmem_limit_bytes)),
        cost_estimate=cost,
    )(planes)


# ------------------------------ wrapper ---------------------------------------
def jzazbz_to_ciexyz(im: jax.Array) -> jax.Array:
    """im: (B, 3, H, W) float32 Jzazbz image -> (B, 3, H, W) CIE XYZ."""
    b, c, h, w = im.shape
    assert c == 3
    x = im.astype(jnp.float32)
    n_pix = h * w

    target_bytes, vmem_cap = _vmem_budget()
    C = _pick_lane_width(n_pix)
    R_raw = -(-n_pix // C)                       # ceil
    tile_r, n_blk = _pick_row_tiling(R_raw, b, C, target_bytes)
    R_pad = tile_r * n_blk
    n_pad = R_pad * C

    flat = x.reshape(b, 3, n_pix)                # reshape only, no transpose
    if n_pad != n_pix:
        flat = jnp.pad(flat, ((0, 0), (0, 0), (0, n_pad - n_pix)))
    planes = flat.reshape(b, 3, R_pad, C)

    block_bytes = 3 * tile_r * C * 4
    # ~3x the double-buffered (2 in + 2 out) block footprint, with a 32 MiB
    # floor for compiler scratch, capped at half the physical VMEM.
    vmem_limit = min(vmem_cap // 2, max(32 << 20, 12 * block_bytes))

    total_px = b * n_pad
    cost = pl.CostEstimate(flops=60 * total_px,
                           transcendentals=16 * total_px,
                           bytes_accessed=24 * total_px)

    out = _run_pallas(planes, tile_r, vmem_limit, cost)
    out = out.reshape(b, 3, n_pad)
    if n_pad != n_pix:
        out = out[:, :, :n_pix]                  # drop padded lanes (may hold NaN)
    return out.reshape(b, 3, h, w)


# --------------------- pure-JAX reference (mirrors torch) ---------------------
def _reference_jzazbz_to_ciexyz(im):
    b, _, h, w = im.shape
    jzazbz = jnp.transpose(im, (0, 2, 3, 1)).reshape(-1, 3)
    iz = (jzazbz[:, 0] + _D0) / (1.0 + _D - _D * (jzazbz[:, 0] + _D0))
    izazbz = jzazbz.at[:, 0].set(iz)
    lpmpsp = izazbz @ jnp.asarray(_IAB_TO_LMSP).T
    vp = lpmpsp ** (1.0 / _P)
    lms = 10000.0 * ((_C1 - vp) / (_C3 * vp - _C2)) ** (1.0 / _N)
    xpypzp = lms @ jnp.asarray(_LMS_TO_XYZ).T
    xyz = xpypzp @ jnp.asarray(_XPYPZP_TO_XYZ).T
    return jnp.transpose(xyz.reshape(b, h, w, 3), (0, 3, 1, 2))


# ------------------------------ demo / smoke test -----------------------------
if __name__ == "__main__":
    key = jax.random.PRNGKey(0)
    k_j, k_a, k_b = jax.random.split(key, 3)
    B, H, W = 2, 16, 16
    # in-gamut Jzazbz values (keeps lp/mp/sp in range so the logs stay real)
    jz = jax.random.uniform(k_j, (B, 1, H, W), jnp.float32, 0.02, 0.12)
    az = jax.random.uniform(k_a, (B, 1, H, W), jnp.float32, -0.03, 0.03)
    bz = jax.random.uniform(k_b, (B, 1, H, W), jnp.float32, -0.03, 0.03)
    im = jnp.concatenate([jz, az, bz], axis=1)          # (2, 3, 16, 16)

    xyz = jax.jit(jzazbz_to_ciexyz)(im)
    jax.block_until_ready(xyz)
    assert xyz.shape == (B, 3, H, W) and xyz.dtype == jnp.float32

    ref = _reference_jzazbz_to_ciexyz(im)
    rel_err = float(jnp.max(jnp.abs(xyz - ref)) / (jnp.max(jnp.abs(ref)) + 1e-30))
    assert rel_err < 5e-3, f"mismatch vs reference: rel_err={rel_err}"
    print("KERNEL_OK")
</pallas_src>

<mosaic_0001>
module attributes {stable_mosaic.version = 11 : i64} {
  func.func @_jzazbz_to_xyz_kernel(%arg0: i32, %arg1: i32, %arg2: memref<1x3x1x256xf32, #tpu.memory_space<vmem>>, %arg3: memref<1x3x1x256xf32, #tpu.memory_space<vmem>>) attributes {dimension_semantics = [#tpu.dimension_semantics<parallel>, #tpu.dimension_semantics<parallel>], iteration_bounds = array<i64: 2, 1>, scalar_prefetch = 0 : i64, scratch_operands = 0 : i64, tpu.core_type = #tpu.core_type<tc>, window_params = [{transform_indices = @transform_0, window_bounds = array<i64: 1, 3, 1, 256>}, {transform_indices = @transform_1, window_bounds = array<i64: 1, 3, 1, 256>}]} {
    %c0 = arith.constant 0 : index
    %c0_0 = arith.constant 0 : index
    %c0_1 = arith.constant 0 : index
    %c0_2 = arith.constant 0 : index
    %0 = vector.load %arg2[%c0, %c0_0, %c0_1, %c0_2] : memref<1x3x1x256xf32, #tpu.memory_space<vmem>>, vector<1x1x1x256xf32>
    %1 = vector.shape_cast %0 : vector<1x1x1x256xf32> to vector<1x256xf32>
    %c0_3 = arith.constant 0 : index
    %c1 = arith.constant 1 : index
    %c0_4 = arith.constant 0 : index
    %c0_5 = arith.constant 0 : index
    %2 = vector.load %arg2[%c0_3, %c1, %c0_4, %c0_5] : memref<1x3x1x256xf32, #tpu.memory_space<vmem>>, vector<1x1x1x256xf32>
    %3 = vector.shape_cast %2 : vector<1x1x1x256xf32> to vector<1x256xf32>
    %c0_6 = arith.constant 0 : index
    %c2 = arith.constant 2 : index
    %c0_7 = arith.constant 0 : index
    %c0_8 = arith.constant 0 : index
    %4 = vector.load %arg2[%c0_6, %c2, %c0_7, %c0_8] : memref<1x3x1x256xf32, #tpu.memory_space<vmem>>, vector<1x1x1x256xf32>
    %5 = vector.shape_cast %4 : vector<1x1x1x256xf32> to vector<1x256xf32>
    %cst = arith.constant 1.629550e-11 : f32
    %6 = vector.broadcast %cst : f32 to vector<1x256xf32>
    %7 = arith.addf %1, %6 : vector<1x256xf32>
    %cst_9 = arith.constant 5.600000e-01 : f32
    %8 = vector.broadcast %cst_9 : f32 to vector<1x256xf32>
    %9 = arith.mulf %8, %7 : vector<1x256xf32>
    %cst_10 = arith.constant 4.400000e-01 : f32
    %10 = vector.broadcast %cst_10 : f32 to vector<1x256xf32>
    %11 = arith.addf %10, %9 : vector<1x256xf32>
    %12 = tpu.reciprocal %11 {approx = true} : vector<1x256xf32> -> vector<1x256xf32>
    %13 = arith.mulf %11, %12 : vector<1x256xf32>
    %cst_11 = arith.constant 2.000000e+00 : f32
    %14 = vector.broadcast %cst_11 : f32 to vector<1x256xf32>
    %15 = arith.subf %14, %13 : vector<1x256xf32>
    %16 = arith.mulf %12, %15 : vector<1x256xf32>
    %17 = arith.mulf %7, %16 : vector<1x256xf32>
    %cst_12 = arith.constant 0.138605043 : f32
    %18 = vector.broadcast %cst_12 : f32 to vector<1x256xf32>
    %19 = arith.mulf %18, %3 : vector<1x256xf32>
    %20 = arith.addf %17, %19 : vector<1x256xf32>
    %cst_13 = arith.constant 0.058047317 : f32
    %21 = vector.broadcast %cst_13 : f32 to vector<1x256xf32>
    %22 = arith.mulf %21, %5 : vector<1x256xf32>
    %23 = arith.addf %20, %22 : vector<1x256xf32>
    %cst_14 = arith.constant -0.138605043 : f32
    %24 = vector.broadcast %cst_14 : f32 to vector<1x256xf32>
    %25 = arith.mulf %24, %3 : vector<1x256xf32>
    %26 = arith.addf %17, %25 : vector<1x256xf32>
    %cst_15 = arith.constant -0.058047317 : f32
    %27 = vector.broadcast %cst_15 : f32 to vector<1x256xf32>
    %28 = arith.mulf %27, %5 : vector<1x256xf32>
    %29 = arith.addf %26, %28 : vector<1x256xf32>
    %cst_16 = arith.constant -0.0960192456 : f32
    %30 = vector.broadcast %cst_16 : f32 to vector<1x256xf32>
    %31 = arith.mulf %30, %3 : vector<1x256xf32>
    %32 = arith.addf %17, %31 : vector<1x256xf32>
    %cst_17 = arith.constant -0.811891913 : f32
    %33 = vector.broadcast %cst_17 : f32 to vector<1x256xf32>
    %34 = arith.mulf %33, %5 : vector<1x256xf32>
    %35 = arith.addf %32, %34 : vector<1x256xf32>
    %36 = math.log %23 : vector<1x256xf32>
    %cst_18 = arith.constant 0.00746077253 : f32
    %37 = vector.broadcast %cst_18 : f32 to vector<1x256xf32>
    %38 = arith.mulf %37, %36 : vector<1x256xf32>
    %39 = math.exp %38 : vector<1x256xf32>
    %cst_19 = arith.constant 0.8359375 : f32
    %40 = vector.broadcast %cst_19 : f32 to vector<1x256xf32>
    %41 = arith.subf %39, %40 : vector<1x256xf32>
    %42 = math.log %41 : vector<1x256xf32>
    %cst_20 = arith.constant 1.868750e+01 : f32
    %43 = vector.broadcast %cst_20 : f32 to vector<1x256xf32>
    %44 = arith.mulf %43, %39 : vector<1x256xf32>
    %cst_21 = arith.constant 18.8515625 : f32
    %45 = vector.broadcast %cst_21 : f32 to vector<1x256xf32>
    %46 = arith.subf %45, %44 : vector<1x256xf32>
    %47 = math.log %46 : vector<1x256xf32>
    %48 = arith.subf %42, %47 : vector<1x256xf32>
    %cst_22 = arith.constant 6.27739477 : f32
    %49 = vector.broadcast %cst_22 : f32 to vector<1x256xf32>
    %50 = arith.mulf %49, %48 : vector<1x256xf32>
    %cst_23 = arith.constant 9.21034049 : f32
    %51 = vector.broadcast %cst_23 : f32 to vector<1x256xf32>
    %52 = arith.addf %50, %51 : vector<1x256xf32>
    %53 = math.exp %52 : vector<1x256xf32>
    %54 = math.log %29 : vector<1x256xf32>
    %cst_24 = arith.constant 0.00746077253 : f32
    %55 = vector.broadcast %cst_24 : f32 to vector<1x256xf32>
    %56 = arith.mulf %55, %54 : vector<1x256xf32>
    %57 = math.exp %56 : vector<1x256xf32>
    %cst_25 = arith.constant 0.8359375 : f32
    %58 = vector.broadcast %cst_25 : f32 to vector<1x256xf32>
    %59 = arith.subf %57, %58 : vector<1x256xf32>
    %60 = math.log %59 : vector<1x256xf32>
    %cst_26 = arith.constant 1.868750e+01 : f32
    %61 = vector.broadcast %cst_26 : f32 to vector<1x256xf32>
    %62 = arith.mulf %61, %57 : vector<1x256xf32>
    %cst_27 = arith.constant 18.8515625 : f32
    %63 = vector.broadcast %cst_27 : f32 to vector<1x256xf32>
    %64 = arith.subf %63, %62 : vector<1x256xf32>
    %65 = math.log %64 : vector<1x256xf32>
    %66 = arith.subf %60, %65 : vector<1x256xf32>
    %cst_28 = arith.constant 6.27739477 : f32
    %67 = vector.broadcast %cst_28 : f32 to vector<1x256xf32>
    %68 = arith.mulf %67, %66 : vector<1x256xf32>
    %cst_29 = arith.constant 9.21034049 : f32
    %69 = vector.broadcast %cst_29 : f32 to vector<1x256xf32>
    %70 = arith.addf %68, %69 : vector<1x256xf32>
    %71 = math.exp %70 : vector<1x256xf32>
    %72 = math.log %35 : vector<1x256xf32>
    %cst_30 = arith.constant 0.00746077253 : f32
    %73 = vector.broadcast %cst_30 : f32 to vector<1x256xf32>
    %74 = arith.mulf %73, %72 : vector<1x256xf32>
    %75 = math.exp %74 : vector<1x256xf32>
    %cst_31 = arith.constant 0.8359375 : f32
    %76 = vector.broadcast %cst_31 : f32 to vector<1x256xf32>
    %77 = arith.subf %75, %76 : vector<1x256xf32>
    %78 = math.log %77 : vector<1x256xf32>
    %cst_32 = arith.constant 1.868750e+01 : f32
    %79 = vector.broadcast %cst_32 : f32 to vector<1x256xf32>
    %80 = arith.mulf %79, %75 : vector<1x256xf32>
    %cst_33 = arith.constant 18.8515625 : f32
    %81 = vector.broadcast %cst_33 : f32 to vector<1x256xf32>
    %82 = arith.subf %81, %80 : vector<1x256xf32>
    %83 = math.log %82 : vector<1x256xf32>
    %84 = arith.subf %78, %83 : vector<1x256xf32>
    %cst_34 = arith.constant 6.27739477 : f32
    %85 = vector.broadcast %cst_34 : f32 to vector<1x256xf32>
    %86 = arith.mulf %85, %84 : vector<1x256xf32>
    %cst_35 = arith.constant 9.21034049 : f32
    %87 = vector.broadcast %cst_35 : f32 to vector<1x256xf32>
    %88 = arith.addf %86, %87 : vector<1x256xf32>
    %89 = math.exp %88 : vector<1x256xf32>
    %cst_36 = arith.constant 1.66137326 : f32
    %90 = vector.broadcast %cst_36 : f32 to vector<1x256xf32>
    %91 = arith.mulf %90, %53 : vector<1x256xf32>
    %cst_37 = arith.constant -0.914523243 : f32
    %92 = vector.broadcast %cst_37 : f32 to vector<1x256xf32>
    %93 = arith.mulf %92, %71 : vector<1x256xf32>
    %94 = arith.addf %91, %93 : vector<1x256xf32>
    %cst_38 = arith.constant 0.231362045 : f32
    %95 = vector.broadcast %cst_38 : f32 to vector<1x256xf32>
    %96 = arith.mulf %95, %89 : vector<1x256xf32>
    %97 = arith.addf %94, %96 : vector<1x256xf32>
    %c0_39 = arith.constant 0 : index
    %c0_40 = arith.constant 0 : index
    %c0_41 = arith.constant 0 : index
    %c0_42 = arith.constant 0 : index
    %98 = vector.load %arg3[%c0_39, %c0_40, %c0_41, %c0_42] : memref<1x3x1x256xf32, #tpu.memory_space<vmem>>, vector<1x1x1x256xf32>
    %99 = vector.shape_cast %98 : vector<1x1x1x256xf32> to vector<1x256xf32>
    %100 = vector.shape_cast %97 : vector<1x256xf32> to vector<1x1x1x256xf32>
    tpu.vector_store %arg3[%c0_39, %c0_40, %c0_41, %c0_42], %100 {strides = array<i32>} : memref<1x3x1x256xf32, #tpu.memory_space<vmem>>, vector<1x1x1x256xf32>,
    %cst_43 = arith.constant -0.325075835 : f32
    %101 = vector.broadcast %cst_43 : f32 to vector<1x256xf32>
    %102 = arith.mulf %101, %53 : vector<1x256xf32>
    %cst_44 = arith.constant 1.57184708 : f32
    %103 = vector.broadcast %cst_44 : f32 to vector<1x256xf32>
    %104 = arith.mulf %103, %71 : vector<1x256xf32>
    %105 = arith.addf %102, %104 : vector<1x256xf32>
    %cst_45 = arith.constant -0.218253791 : f32
    %106 = vector.broadcast %cst_45 : f32 to vector<1x256xf32>
    %107 = arith.mulf %106, %89 : vector<1x256xf32>
    %108 = arith.addf %105, %107 : vector<1x256xf32>
    %c0_46 = arith.constant 0 : index
    %c1_47 = arith.constant 1 : index
    %c0_48 = arith.constant 0 : index
    %c0_49 = arith.constant 0 : index
    %109 = vector.load %arg3[%c0_46, %c1_47, %c0_48, %c0_49] : memref<1x3x1x256xf32, #tpu.memory_space<vmem>>, vector<1x1x1x256xf32>
    %110 = vector.shape_cast %109 : vector<1x1x1x256xf32> to vector<1x256xf32>
    %111 = vector.shape_cast %108 : vector<1x256xf32> to vector<1x1x1x256xf32>
    tpu.vector_store %arg3[%c0_46, %c1_47, %c0_48, %c0_49], %111 {strides = array<i32>} : memref<1x3x1x256xf32, #tpu.memory_space<vmem>>, vector<1x1x1x256xf32>,
    %cst_50 = arith.constant -0.0909828171 : f32
    %112 = vector.broadcast %cst_50 : f32 to vector<1x256xf32>
    %113 = arith.mulf %112, %53 : vector<1x256xf32>
    %cst_51 = arith.constant -0.312728286 : f32
    %114 = vector.broadcast %cst_51 : f32 to vector<1x256xf32>
    %115 = arith.mulf %114, %71 : vector<1x256xf32>
    %116 = arith.addf %113, %115 : vector<1x256xf32>
    %cst_52 = arith.constant 1.52276647 : f32
    %117 = vector.broadcast %cst_52 : f32 to vector<1x256xf32>
    %118 = arith.mulf %117, %89 : vector<1x256xf32>
    %119 = arith.addf %116, %118 : vector<1x256xf32>
    %c0_53 = arith.constant 0 : index
    %c2_54 = arith.constant 2 : index
    %c0_55 = arith.constant 0 : index
    %c0_56 = arith.constant 0 : index
    %120 = vector.load %arg3[%c0_53, %c2_54, %c0_55, %c0_56] : memref<1x3x1x256xf32, #tpu.memory_space<vmem>>, vector<1x1x1x256xf32>
    %121 = vector.shape_cast %120 : vector<1x1x1x256xf32> to vector<1x256xf32>
    %122 = vector.shape_cast %119 : vector<1x256xf32> to vector<1x1x1x256xf32>
    tpu.vector_store %arg3[%c0_53, %c2_54, %c0_55, %c0_56], %122 {strides = array<i32>} : memref<1x3x1x256xf32, #tpu.memory_space<vmem>>, vector<1x1x1x256xf32>,
    return
  }
  func.func @transform_0(%arg0: i32, %arg1: i32) -> (i32, i32, i32, i32) {
    %c0_i32 = arith.constant 0 : i32
    %c0_i32_0 = arith.constant 0 : i32
    %c0_i32_1 = arith.constant 0 : i32
    return %arg0, %c0_i32, %arg1, %c0_i32_0 : i32, i32, i32, i32
  }
  func.func @transform_1(%arg0: i32, %arg1: i32) -> (i32, i32, i32, i32) {
    %c0_i32 = arith.constant 0 : i32
    %c0_i32_0 = arith.constant 0 : i32
    %c0_i32_1 = arith.constant 0 : i32
    return %arg0, %c0_i32, %arg1, %c0_i32_0 : i32, i32, i32, i32
  }
}

</mosaic_0001>

<llo_original>
// kernel: jzazbz_to_ciexyz.1
$region0: #{jzazbz_to_ciexyz.1}
  #allocation0 [shape = 'u32[]', space=smem, size = 0x4, offset = 0x4, fixed_abs, tag = 'smem constant byte address 0x4 - core index']
  #allocation1 [shape = 'u32[144,128]{1,0:T(1,128)}', space=vmem, size = 0x12000, scoped, tag = 'internal scratch']
  %s0 = inlined_call_operand.vmem [shape: f32[2,3,1,256], index: 0, kind: input, shape index: {}]
  %s1 = inlined_call_operand.vmem [shape: f32[2,3,1,256], index: 1, kind: output, shape index: {}]
  %s2 = sld [smem:[#allocation0]]
  $region37: #{jzazbz_to_ciexyz.1} parent=0
    _
  %s4 = ssub.s32 1, %s2
  %s5 = scalar_select 0, %s4, %s2
  loop: start=0, step=1, limit=4
  $region2: #{jzazbz_to_ciexyz.1} parent=0 // loop_pre_header
    _
  $region3: #{jzazbz_to_ciexyz.1} parent=0 // loop_header
    %s7 = sphi 0, %s11
    %p8 = scmp.ge.s32.totalorder %s7, 4
    %s14 = sphi 0, %s26
    %s15 = sphi 0, %s22
    %s16 = sphi 0, %s14
    %s17 = sphi 0, %s15
    %s18 = sphi 0, %s16
    %s19 = sphi 0, %s17
    %s31 = sphi 0, %s33
    %s34 = sphi 0, %s31
    %s35 = sphi 0, %s34
    %s51 = sphi 0, %s35
    %s59 = sphi 0, %s61
    %s62 = sphi 0, %s59
    %s63 = sphi 0, %s62
    %s79 = sphi 0, %s63
  $region4: #{jzazbz_to_ciexyz.1} parent=0 // loop_header_branch
    %10 = sbr.rel (%p8) target = $region8
  $region5: #{jzazbz_to_ciexyz.1} parent=0 // loop_body
    %s12 = ssub.s32 %s7, 1
    %s13 = ssub.s32 %s7, 2
    %s20 = sadd.s32 1, %s15
    %p21 = scmp.ge.s32.totalorder %s20, 1
    %s22 = scalar_select %p21, 0, %s20
    %s23 = sadd.s32 1, %s14
    %s24 = scalar_select %p21, %s23, %s14
    %p25 = scmp.ge.s32.totalorder %s24, 2
    %s26 = scalar_select %p25, 0, %s24
    %s27 = ssub.s32 %s14, %s26
    %s28 = ssub.s32 %s15, %s22
    %s29 = sor.u32 %s27, %s28
    %p30 = scmp.eq.s32.totalorder %s29, 0
    %s32 = sadd.s32 %s31, 1
    %s33 = scalar_select %p30, %s31, %s32
    %p36 = pneg %p30
    %p37 = scmp.eq.s32.totalorder %s7, 1
    %p38 = por %p36, %p37
    %p39 = scmp.ne.s32.totalorder %s31, %s34
    %p40 = scmp.eq.s32.totalorder %s7, 0
    %p41 = por %p39, %p40
    %p42 = scmp.ne.s32.totalorder %s31, %s34
    %p43 = scmp.eq.s32.totalorder %s12, 1
    %p44 = por %p42, %p43
    %p45 = scmp.ne.s32.totalorder %s34, %s35
    %p46 = scmp.eq.s32.totalorder %s12, 0
    %p47 = por %p45, %p46
    %p48 = scmp.ne.s32.totalorder %s34, %s35
    %p49 = scmp.eq.s32.totalorder %s13, 1
    %p50 = por %p48, %p49
    %p52 = scmp.ne.s32.totalorder %s35, %s51
    %p53 = scmp.eq.s32.totalorder %s13, 0
    %p54 = por %p52, %p53
    %s55 = ssub.s32 %s14, %s26
    %s56 = ssub.s32 %s15, %s22
    %s57 = sor.u32 %s55, %s56
    %p58 = scmp.eq.s32.totalorder %s57, 0
    %s60 = sadd.s32 %s59, 1
    %s61 = scalar_select %p58, %s59, %s60
    %p64 = pneg %p58
    %p65 = scmp.eq.s32.totalorder %s7, 1
    %p66 = por %p64, %p65
    %p67 = scmp.ne.s32.totalorder %s59, %s62
    %p68 = scmp.eq.s32.totalorder %s7, 0
    %p69 = por %p67, %p68
    %p70 = scmp.ne.s32.totalorder %s59, %s62
    %p71 = scmp.eq.s32.totalorder %s12, 1
    %p72 = por %p70, %p71
    %p73 = scmp.ne.s32.totalorder %s62, %s63
    %p74 = scmp.eq.s32.totalorder %s12, 0
    %p75 = por %p73, %p74
    %p76 = scmp.ne.s32.totalorder %s62, %s63
    %p77 = scmp.eq.s32.totalorder %s13, 1
    %p78 = por %p76, %p77
    %p80 = scmp.ne.s32.totalorder %s63, %s79
    %p81 = scmp.eq.s32.totalorder %s13, 0
    %p82 = por %p80, %p81
    %p83 = scmp.le.s32.totalorder 1, %s7
    %p84 = scmp.lt.s32.totalorder %s7, 3
    %p85 = pnand %p83, %p84
    %p86 = pneg %p85
    // Predicated region
    $region9: #{jzazbz_to_ciexyz.1} parent=5 // pred_check
      _
    $region10: #{jzazbz_to_ciexyz.1} parent=5 // pred_check_branch
      %88 = sbr.rel (%p85) target = $region12
    $region11: #{jzazbz_to_ciexyz.1} parent=5 // pred_region
      %s89 = ssub.s32 %s7, 1
    $region12: #{jzazbz_to_ciexyz.1} parent=5 // pred_fallthru
      _
    %p90 = scmp.lt.s32.totalorder %s7, 2
    // Predicated region
    $region13: #{jzazbz_to_ciexyz.1} parent=5 // pred_check
      %p91 = pneg %p90
    $region14: #{jzazbz_to_ciexyz.1} parent=5 // pred_check_branch
      %93 = sbr.rel (%p91) target = $region16
    $region15: #{jzazbz_to_ciexyz.1} parent=5 // pred_region
      // Predicated region
      $region17: #{jzazbz_to_ciexyz.1} parent=15 // pred_check
        %p94 = pneg %p41
      $region18: #{jzazbz_to_ciexyz.1} parent=15 // pred_check_branch
        %96 = sbr.rel (%p94) target = $region20
      $region19: #{jzazbz_to_ciexyz.1} parent=15 // pred_region
        %p97 = scmp.lt.s32.totalorder %s14, 1
        %s98 = scalar_select %p97, %s14, 1
        %p99 = scmp.lt.s32.totalorder %s15, 0
        %s100 = scalar_select %p99, %s15, 0
        %s101 = smul.addr %s100, 2
        %s102 = smul.addr %s98, 6
        %s103 = sadd.s32 %s101, %s102
        %s104 = scalar_lea.vmem %s0, %s103
      $region20: #{jzazbz_to_ciexyz.1} parent=15 // pred_fallthru
        _
    $region16: #{jzazbz_to_ciexyz.1} parent=5 // pred_fallthru
      _
    %p105 = scmp.le.s32.totalorder 1, %s7
    %p106 = scmp.lt.s32.totalorder %s7, 3
    %p107 = pnand %p105, %p106
    %p108 = pneg %p107
    // Predicated region
    $region21: #{jzazbz_to_ciexyz.1} parent=5 // pred_check
      _
    $region22: #{jzazbz_to_ciexyz.1} parent=5 // pred_check_branch
      %110 = sbr.rel (%p107) target = $region24
    $region23: #{jzazbz_to_ciexyz.1} parent=5 // pred_region
      %s111 = ssub.s32 %s7, 1
      %p112 = scmp.lt.s32.totalorder %s16, 1
      %s113 = scalar_select %p112, %s16, 1
      %p114 = scmp.lt.s32.totalorder %s17, 0
      %s115 = scalar_select %p114, %s17, 0
      %s116 = smul.addr %s115, 2
      %s117 = smul.addr %s113, 6
      %s118 = sadd.s32 %s116, %s117
      %s119 = scalar_lea.vmem %s0, %s118
      %p120 = pneg %p47
      %p121 = pneg %p44
      %p122 = pneg %p75
      %p123 = pneg %p72
      %p124 = scmp.lt.s32.totalorder %s16, 1
      %s125 = scalar_select %p124, %s16, 1
      %p126 = scmp.lt.s32.totalorder %s17, 0
      %s127 = scalar_select %p126, %s17, 0
      %s128 = smul.addr %s127, 2
      %s129 = smul.addr %s125, 6
      %s130 = sadd.s32 %s128, %s129
      %s131 = scalar_lea.vmem %s1, %s130
      %p132 = scmp.lt.s32.totalorder %s16, 1
      %s133 = scalar_select %p132, %s16, 1
      %p134 = scmp.lt.s32.totalorder %s17, 0
      %s135 = scalar_select %p134, %s17, 0
      %s136 = smul.addr %s135, 2
      %s137 = smul.addr %s133, 6
      %s138 = sadd.s32 %s136, %s137
      %s139 = scalar_lea.vmem %s0, %s138
      %p140 = scmp.lt.s32.totalorder %s16, 1
      %s141 = scalar_select %p140, %s16, 1
      %p142 = scmp.lt.s32.totalorder %s17, 0
      %s143 = scalar_select %p142, %s17, 0
      %s144 = smul.addr %s143, 2
      %s145 = smul.addr %s141, 6
      %s146 = sadd.s32 %s144, %s145
      %s147 = scalar_lea.vmem %s1, %s146
      %v148 = vld [vmem:[%s139] sm:$0x3]
      %s149 = scalar_lea.vmem %s139, 2
      %v150 = vld [vmem:[%s149] sm:$0x3]
      %s151 = scalar_lea.vmem %s139, 4
      %v152 = vld [vmem:[%s151] sm:$0x3]
      %v153 = vadd.f32 %v148, 1.62955e-11
      %v154 = vmul.f32 %v153, 0.56
      %v155 = vadd.f32 %v154, 0.44
      %v156 = vrcp.pop %v155
      %v157 = vmul.f32 %v155, %v156
      %v158 = vsub.f32 2.0, %v157
      %v159 = vmul.f32 %v156, %v158
      %v160 = vmul.f32 %v153, %v159
      %v161 = vmul.f32 %v150, 0.13860504
      %v162 = vadd.f32 %v160, %v161
      %v163 = vmul.f32 %v152, 0.058047317
      %v164 = vadd.f32 %v162, %v163
      %v165 = vmul.f32 %v150, -0.13860504
      %v166 = vadd.f32 %v160, %v165
      %v167 = vmul.f32 %v152, -0.058047317
      %v168 = vadd.f32 %v166, %v167
      %v169 = vmul.f32 %v150, -0.096019246
      %v170 = vadd.f32 %v160, %v169
      %v171 = vmul.f32 %v152, -0.8118919
      %v172 = vadd.f32 %v170, %v171
      %v173 = vlog2.pop %v164
      %v174 = vmul.f32 %v173, 0.6931472
      %v175 = vmul.f32 %v174, 0.0074607725
      %v176 = vmul.f32 %v175, 1.442695
      %v177 = vpow.pop %v176
      %v178 = vsub.f32 %v177, 0.8359375
      %v179 = vlog2.pop %v178
      %v180 = vmul.f32 %v179, 0.6931472
      %v181 = vmul.f32 %v177, 18.6875
      %v182 = vsub.f32 18.851563, %v181
      %v183 = vlog2.pop %v182
      %v184 = vmul.f32 %v183, 0.6931472
      %v185 = vsub.f32 %v180, %v184
      %v186 = vmul.f32 %v185, 6.277395
      %v187 = vadd.f32 %v186, 9.2103405
      %v188 = vmul.f32 %v187, 1.442695
      %v189 = vpow.pop %v188
      %v190 = vlog2.pop %v168
      %v191 = vmul.f32 %v190, 0.6931472
      %v192 = vmul.f32 %v191, 0.0074607725
      %v193 = vmul.f32 %v192, 1.442695
      %v194 = vpow.pop %v193
      %v195 = vsub.f32 %v194, 0.8359375
      %v196 = vlog2.pop %v195
      %v197 = vmul.f32 %v196, 0.6931472
      %v198 = vmul.f32 %v194, 18.6875
      %v199 = vsub.f32 18.851563, %v198
      %v200 = vlog2.pop %v199
      %v201 = vmul.f32 %v200, 0.6931472
      %v202 = vsub.f32 %v197, %v201
      %v203 = vmul.f32 %v202, 6.277395
      %v204 = vadd.f32 %v203, 9.2103405
      %v205 = vmul.f32 %v204, 1.442695
      %v206 = vpow.pop %v205
      %v207 = vlog2.pop %v172
      %v208 = vmul.f32 %v207, 0.6931472
      %v209 = vmul.f32 %v208, 0.0074607725
      %v210 = vmul.f32 %v209, 1.442695
      %v211 = vpow.pop %v210
      %v212 = vsub.f32 %v211, 0.8359375
      %v213 = vlog2.pop %v212
      %v214 = vmul.f32 %v213, 0.6931472
      %v215 = vmul.f32 %v211, 18.6875
      %v216 = vsub.f32 18.851563, %v215
      %v217 = vlog2.pop %v216
      %v218 = vmul.f32 %v217, 0.6931472
      %v219 = vsub.f32 %v214, %v218
      %v220 = vmul.f32 %v219, 6.277395
      %v221 = vadd.f32 %v220, 9.2103405
      %v222 = vmul.f32 %v221, 1.442695
      %v223 = vpow.pop %v222
      %v224 = vmul.f32 %v189, 1.6613733
      %v225 = vmul.f32 %v206, -0.91452324
      %v226 = vadd.f32 %v224, %v225
      %v227 = vmul.f32 %v223, 0.23136204
      %v228 = vadd.f32 %v226, %v227
      %v229 = vlaneseq
      %vm230 = vcmp.ge.s32.totalorder %v229, 0
      %vm231 = vcmp.lt.s32.totalorder %v229, 256
      %vm232 = vmand %vm230, %vm231
      %233 = vst.msk [vmem:[%s147] sm:$0x3] %vm232, %v228
      %v234 = vmul.f32 %v189, -0.32507583
      %v235 = vmul.f32 %v206, 1.5718471
      %v236 = vadd.f32 %v234, %v235
      %v237 = vmul.f32 %v223, -0.21825379
      %v238 = vadd.f32 %v236, %v237
      %s239 = scalar_lea.vmem %s147, 2
      %240 = vst.msk [vmem:[%s239] sm:$0x3] %vm232, %v238
      %v241 = vmul.f32 %v189, -0.09098282
      %v242 = vmul.f32 %v206, -0.3127283
      %v243 = vadd.f32 %v241, %v242
      %v244 = vmul.f32 %v223, 1.5227665
      %v245 = vadd.f32 %v243, %v244
      %s246 = scalar_lea.vmem %s147, 4
      %247 = vst.msk [vmem:[%s246] sm:$0x3] %vm232, %v245
      %p248 = scmp.lt.s32.totalorder %s16, 1
      %s249 = scalar_select %p248, %s16, 1
      %p250 = scmp.lt.s32.totalorder %s17, 0
      %s251 = scalar_select %p250, %s17, 0
      %s252 = smul.addr %s251, 2
      %s253 = smul.addr %s249, 6
      %s254 = sadd.s32 %s252, %s253
      %s255 = scalar_lea.vmem %s1, %s254
      // Predicated region
      $region25: #{jzazbz_to_ciexyz.1} parent=23 // pred_check
        %p256 = pneg %p72
      $region26: #{jzazbz_to_ciexyz.1} parent=23 // pred_check_branch
        %258 = sbr.rel (%p256) target = $region28
      $region27: #{jzazbz_to_ciexyz.1} parent=23 // pred_region
        _
      $region28: #{jzazbz_to_ciexyz.1} parent=23 // pred_fallthru
        _
    $region24: #{jzazbz_to_ciexyz.1} parent=5 // pred_fallthru
      _
    %p259 = scmp.le.s32.totalorder 2, %s7
    // Predicated region
    $region29: #{jzazbz_to_ciexyz.1} parent=5 // pred_check
      %p260 = pneg %p259
    $region30: #{jzazbz_to_ciexyz.1} parent=5 // pred_check_branch
      %262 = sbr.rel (%p260) target = $region32
    $region31: #{jzazbz_to_ciexyz.1} parent=5 // pred_region
      %s263 = ssub.s32 %s7, 2
      // Predicated region
      $region33: #{jzazbz_to_ciexyz.1} parent=31 // pred_check
        %p264 = pneg %p78
      $region34: #{jzazbz_to_ciexyz.1} parent=31 // pred_check_branch
        %266 = sbr.rel (%p264) target = $region36
      $region35: #{jzazbz_to_ciexyz.1} parent=31 // pred_region
        %p267 = scmp.lt.s32.totalorder %s18, 1
        %s268 = scalar_select %p267, %s18, 1
        %p269 = scmp.lt.s32.totalorder %s19, 0
        %s270 = scalar_select %p269, %s19, 0
        %s271 = smul.addr %s270, 2
        %s272 = smul.addr %s268, 6
        %s273 = sadd.s32 %s271, %s272
        %s274 = scalar_lea.vmem %s1, %s273
      $region36: #{jzazbz_to_ciexyz.1} parent=31 // pred_fallthru
        _
    $region32: #{jzazbz_to_ciexyz.1} parent=5 // pred_fallthru
      _
  $region6: #{jzazbz_to_ciexyz.1} parent=0 // loop_footer
    %s11 = sadd.s32 1, %s7
  $region7: #{jzazbz_to_ciexyz.1} parent=0 // loop_footer_branch
    %6 = sbr.rel target = $region3
  $region8: #{jzazbz_to_ciexyz.1} parent=0 // loop_exit
    _

</llo_original>
